<compile_context>
chip_gen: v7x
topology: tpu7x:2x2x1
jax: 0.10.0
libtpu: 0.0.40
codegen_flags: <defaults>
</compile_context>

<pallas_src>
import jax
import jax.numpy as jnp
from jax.experimental import pallas as pl
from jax.experimental.pallas import tpu as pltpu


# ------------------------------------------------------------------ helpers

def _softmax_last(x):
    m = jnp.max(x, axis=-1, keepdims=True)
    e = jnp.exp(x - m)
    # EUP approximate reciprocal: keeps the divide off the VPU.
    return e * pl.reciprocal(jnp.sum(e, axis=-1, keepdims=True), approx=True)


def _pick_tq(n, max_tile=256):
    """Largest query-row tile <= max_tile that divides N (multiple of 8)."""
    if n <= max_tile:
        return n
    for t in range(max_tile, 7, -1):
        if n % t == 0 and t % 8 == 0:
            return t
    return n


def _interp_matrix(dst, src):
    # Bilinear, align_corners=True (matches F.interpolate semantics).
    if dst == 1:
        pos = jnp.zeros((1,), jnp.float32)
    else:
        pos = jnp.arange(dst, dtype=jnp.float32) * (src - 1) / (dst - 1)
    lo = jnp.clip(jnp.floor(pos).astype(jnp.int32), 0, src - 1)
    hi = jnp.clip(lo + 1, 0, src - 1)
    frac = pos - lo.astype(jnp.float32)
    return (jax.nn.one_hot(lo, src, dtype=jnp.float32) * (1.0 - frac)[:, None]
            + jax.nn.one_hot(hi, src, dtype=jnp.float32) * frac[:, None])


# ------------------------------------------------------------------ conv 3x3

def _conv3x3_body(xp_ref, w_ref, scale_ref, bias_ref):
    # xp_ref : (1, H+2, W+2, Cin)  padded input tile (bf16)
    # w_ref  : (9*Cin, Cout)       conv weight, HWIO flattened (bf16)
    # scale/bias: (1, Cout)        fused eval-mode BatchNorm affine (f32)
    Hp, Wp, Cin = xp_ref.shape[1], xp_ref.shape[2], xp_ref.shape[3]
    H, W = Hp - 2, Wp - 2
    xp = xp_ref[0].astype(jnp.float32)
    # im2col: one big-K matmul instead of 9 small ones.
    cols = [xp[ky:ky + H, kx:kx + W, :].reshape(H * W, Cin)
            for ky in range(3) for kx in range(3)]
    patches = jnp.concatenate(cols, axis=-1).astype(jnp.bfloat16)   # (H*W, 9*Cin)
    y = jnp.dot(patches, w_ref[...], preferred_element_type=jnp.float32)
    y = y * scale_ref[...] + bias_ref[...]
    return jnp.maximum(y, 0.0)                                       # (H*W, Cout) f32


def _conv3x3_bn_relu_kernel(xp_ref, w_ref, scale_ref, bias_ref, o_ref):
    # o_ref: (1, H*W, Cout) — flattened so the attention stage needs no reshape.
    o_ref[0] = _conv3x3_body(xp_ref, w_ref, scale_ref, bias_ref)


def _conv3x3_bn_relu_cls_kernel(xp_ref, w_ref, scale_ref, bias_ref,
                                cls_wt_ref, cls_b_ref, logits_ref):
    # sa_out_conv fused with the 1x1 classifier (sa_cls_seg, eval: no dropout).
    # logits_ref: (1, classes, H*W) — pixel axis on the lanes (dense stores).
    y = _conv3x3_body(xp_ref, w_ref, scale_ref, bias_ref)            # (H*W, Cout)
    logits_t = jnp.einsum('cd,nd->cn', cls_wt_ref[...], y.astype(jnp.bfloat16),
                          preferred_element_type=jnp.float32) + cls_b_ref[...]
    logits_ref[0] = logits_t


def conv3x3_bn_relu(x_nhwc, w9, scale, bias):
    """3x3 conv (pad=1, bias=False) + fused eval BN + ReLU -> (B, H*W, Cout)."""
    B, H, W, Cin = x_nhwc.shape
    Cout = w9.shape[-1]
    # Halo materialized host-side in bf16 (half the f32 HBM traffic).
    xp = jnp.pad(x_nhwc.astype(jnp.bfloat16), ((0, 0), (1, 1), (1, 1), (0, 0)))
    return pl.pallas_call(
        _conv3x3_bn_relu_kernel,
        out_shape=jax.ShapeDtypeStruct((B, H * W, Cout), jnp.float32),
        grid=(B,),
        in_specs=[
            pl.BlockSpec((1, H + 2, W + 2, Cin), lambda b: (b, 0, 0, 0)),
            pl.BlockSpec((9 * Cin, Cout), lambda b: (0, 0)),
            pl.BlockSpec((1, Cout), lambda b: (0, 0)),
            pl.BlockSpec((1, Cout), lambda b: (0, 0)),
        ],
        out_specs=pl.BlockSpec((1, H * W, Cout), lambda b: (b, 0, 0)),
        compiler_params=pltpu.CompilerParams(dimension_semantics=("parallel",)),
    )(xp, w9, scale.reshape(1, Cout), bias.reshape(1, Cout))


def conv3x3_bn_relu_cls(x_nhwc, w9, scale, bias, cls_wt, cls_b):
    """sa_out_conv (3x3 ConvBNReLU) fused with sa_cls_seg -> (B, classes, H*W)."""
    B, H, W, Cin = x_nhwc.shape
    Cout = w9.shape[-1]
    classes = cls_wt.shape[0]
    xp = jnp.pad(x_nhwc.astype(jnp.bfloat16), ((0, 0), (1, 1), (1, 1), (0, 0)))
    return pl.pallas_call(
        _conv3x3_bn_relu_cls_kernel,
        out_shape=jax.ShapeDtypeStruct((B, classes, H * W), jnp.float32),
        grid=(B,),
        in_specs=[
            pl.BlockSpec((1, H + 2, W + 2, Cin), lambda b: (b, 0, 0, 0)),
            pl.BlockSpec((9 * Cin, Cout), lambda b: (0, 0)),
            pl.BlockSpec((1, Cout), lambda b: (0, 0)),
            pl.BlockSpec((1, Cout), lambda b: (0, 0)),
            pl.BlockSpec((classes, Cout), lambda b: (0, 0)),
            pl.BlockSpec((classes, 1), lambda b: (0, 0)),
        ],
        out_specs=pl.BlockSpec((1, classes, H * W), lambda b: (b, 0, 0)),
        compiler_params=pltpu.CompilerParams(dimension_semantics=("parallel",)),
    )(xp, w9, scale.reshape(1, Cout), bias.reshape(1, Cout), cls_wt, cls_b)


# ------------------------------------------------------------------ attention

def self_attention(x_bnc, wqkv, bqkv, gamma, tq=None, with_value_attention=True):
    """SelfAttentionBlock on flattened (B, N, C) features.

    wqkv: (C, Cq + C + Cq) bf16, columns = [wq | wv | wk];  bqkv: (1, Cq+C+Cq).
    Returns (out, qk_attention, vv_attention) — vv_attention is None when
    with_value_attention=False (it never feeds the output tensor).
    """
    B, N, C = x_bnc.shape
    total = wqkv.shape[1]
    Cq = (total - C) // 2
    if tq is None:
        tq = _pick_tq(N)
    assert N % tq == 0
    nq = N // tq
    g = jnp.asarray(gamma, jnp.float32).reshape(1, 1)

    def kernel(xf_ref, xb_ref, w_ref, b_ref, g_ref, out_ref, attn_ref,
               *maybe_vattn):
        W = w_ref[...]                              # (C, Cq+C+Cq) bf16
        bias = b_ref[...]                           # (1, Cq+C+Cq) f32
        xf = xf_ref[0]                              # (N, C)  full rows (f32)
        xb = xb_ref[0]                              # (tq, C) query-block rows

        # Fused K|V projection over all N rows (one wide MXU pass).
        vk = jnp.dot(xf.astype(jnp.bfloat16), W[:, Cq:],
                     preferred_element_type=jnp.float32) + bias[:, Cq:]
        v_full = vk[:, :C]                          # (N, C)
        k_full = vk[:, C:]                          # (N, Cq)

        # Fused Q|V projection for this query block only.
        qv = jnp.dot(xb.astype(jnp.bfloat16), W[:, :Cq + C],
                     preferred_element_type=jnp.float32) + bias[:, :Cq + C]
        q_blk = qv[:, :Cq]                          # (tq, Cq)
        v_blk = qv[:, Cq:]                          # (tq, C)

        v_full_b = v_full.astype(jnp.bfloat16)

        # energy[i, j] = q_i . k_j  -> softmax over j (full row available)
        energy = jnp.einsum('qc,kc->qk', q_blk.astype(jnp.bfloat16),
                            k_full.astype(jnp.bfloat16),
                            preferred_element_type=jnp.float32)      # (tq, N)
        attn = _softmax_last(energy)

        # torch: out[c, i] = sum_j V[c, j] * attn[i, j]  ->  attn @ V in (N, C)
        out = jnp.dot(attn.astype(jnp.bfloat16), v_full_b,
                      preferred_element_type=jnp.float32)            # (tq, C)
        out_ref[0] = g_ref[0, 0] * out + xb
        attn_ref[0] = attn

        if with_value_attention:
            vattn_ref, = maybe_vattn
            venergy = jnp.einsum('qc,kc->qk', v_blk.astype(jnp.bfloat16),
                                 v_full_b, preferred_element_type=jnp.float32)
            vattn_ref[0] = _softmax_last(venergy)

    out_shapes = [jax.ShapeDtypeStruct((B, N, C), jnp.float32),
                  jax.ShapeDtypeStruct((B, N, N), jnp.float32)]
    out_specs = [pl.BlockSpec((1, tq, C), lambda b, qi: (b, qi, 0)),
                 pl.BlockSpec((1, tq, N), lambda b, qi: (b, qi, 0))]
    if with_value_attention:
        out_shapes.append(jax.ShapeDtypeStruct((B, N, N), jnp.float32))
        out_specs.append(pl.BlockSpec((1, tq, N), lambda b, qi: (b, qi, 0)))

    results = pl.pallas_call(
        kernel,
        out_shape=tuple(out_shapes),
        grid=(B, nq),
        in_specs=[
            pl.BlockSpec((1, N, C), lambda b, qi: (b, 0, 0)),    # full rows
            pl.BlockSpec((1, tq, C), lambda b, qi: (b, qi, 0)),  # query block
            pl.BlockSpec((C, total), lambda b, qi: (0, 0)),
            pl.BlockSpec((1, total), lambda b, qi: (0, 0)),
            pl.BlockSpec(memory_space=pltpu.MemorySpace.SMEM),   # gamma scalar
        ],
        out_specs=tuple(out_specs),
        compiler_params=pltpu.CompilerParams(
            dimension_semantics=("parallel", "parallel")),
    )(x_bnc, x_bnc, wqkv, bqkv, g)

    if with_value_attention:
        return results
    out, attn = results
    return out, attn, None


# ------------------------------------------------------------------ upsample

def _bilinear_kernel(x_ref, mh_ref, mwt_ref, o_ref):
    # x_ref: (1, classes, Hf, Wf), o_ref: (1, classes, h, w)
    # Separable align_corners bilinear:  out[c] = Mh @ x[c] @ Mw^T
    Cc = x_ref.shape[1]
    for c in range(Cc):
        t = jnp.dot(mh_ref[...], x_ref[0, c], preferred_element_type=jnp.float32)
        o_ref[0, c] = jnp.dot(t, mwt_ref[...], preferred_element_type=jnp.float32)


def bilinear_upsample(logits_bcn, Hf, Wf, h, w):
    B, Cc, _ = logits_bcn.shape
    x = logits_bcn.reshape(B, Cc, Hf, Wf)          # contiguous, free reshape
    Mh = _interp_matrix(h, Hf)                     # (h, Hf)
    MwT = _interp_matrix(w, Wf).T                  # (Wf, w)
    return pl.pallas_call(
        _bilinear_kernel,
        out_shape=jax.ShapeDtypeStruct((B, Cc, h, w), jnp.float32),
        grid=(B,),
        in_specs=[
            pl.BlockSpec((1, Cc, Hf, Wf), lambda b: (b, 0, 0, 0)),
            pl.BlockSpec((h, Hf), lambda b: (0, 0)),
            pl.BlockSpec((Wf, w), lambda b: (0, 0)),
        ],
        out_specs=pl.BlockSpec((1, Cc, h, w), lambda b: (b, 0, 0, 0)),
        compiler_params=pltpu.CompilerParams(dimension_semantics=("parallel",)),
    )(x, Mh, MwT)


# ------------------------------------------------------------------ params

def init_params(key, fea_dim, down_dim, classes):
    ks = jax.random.split(key, 12)

    def conv_w(k, cin, cout):
        return 0.1 * jax.random.normal(k, (3, 3, cin, cout), jnp.float32)

    def bn_fused(k, c):
        k1, k2, k3, k4 = jax.random.split(k, 4)
        w = 1.0 + 0.1 * jax.random.normal(k1, (c,), jnp.float32)
        b = 0.1 * jax.random.normal(k2, (c,), jnp.float32)
        mean = 0.1 * jax.random.normal(k3, (c,), jnp.float32)
        var = jax.random.uniform(k4, (c,), jnp.float32, minval=0.5, maxval=1.5)
        scale = w / jnp.sqrt(var + 1e-5)
        return scale, b - mean * scale

    qk = down_dim // 8
    in_w = conv_w(ks[0], fea_dim, down_dim)
    out_w = conv_w(ks[2], down_dim, down_dim)
    in_scale, in_bias = bn_fused(ks[1], down_dim)
    out_scale, out_bias = bn_fused(ks[3], down_dim)
    wq = 0.1 * jax.random.normal(ks[4], (down_dim, qk), jnp.float32)
    bq = 0.1 * jax.random.normal(ks[5], (qk,), jnp.float32)
    wk = 0.1 * jax.random.normal(ks[6], (down_dim, qk), jnp.float32)
    bk = 0.1 * jax.random.normal(ks[7], (qk,), jnp.float32)
    wv = 0.1 * jax.random.normal(ks[8], (down_dim, down_dim), jnp.float32)
    bv = 0.1 * jax.random.normal(ks[9], (down_dim,), jnp.float32)
    cls_w = 0.1 * jax.random.normal(ks[10], (down_dim, classes), jnp.float32)
    cls_b = 0.1 * jax.random.normal(ks[11], (classes,), jnp.float32)

    return dict(
        # 3x3 weights: HWIO -> (9*Cin, Cout), bf16 MXU operands.
        in_w9=in_w.reshape(9 * fea_dim, down_dim).astype(jnp.bfloat16),
        in_scale=in_scale, in_bias=in_bias,
        out_w9=out_w.reshape(9 * down_dim, down_dim).astype(jnp.bfloat16),
        out_scale=out_scale, out_bias=out_bias,
        # fused attention projections, column layout [wq | wv | wk].
        wqkv=jnp.concatenate([wq, wv, wk], axis=1).astype(jnp.bfloat16),
        bqkv=jnp.concatenate([bq, bv, bk]).reshape(1, 2 * qk + down_dim),
        gamma=jnp.zeros((), jnp.float32),          # nn.Parameter(torch.zeros(1))
        # 1x1 classifier stored transposed -> (classes, N) lane-dense logits.
        cls_wt=cls_w.T.astype(jnp.bfloat16),
        cls_b=cls_b.reshape(classes, 1),
    )


# ------------------------------------------------------------------ forward

def sanet_head_forward(feat_nchw, params, in_hw, zoom_factor=8,
                       with_value_attention=True):
    """SANet head on the backbone feature map (B, fea_dim, Hf, Wf), NCHW.
    Returns (logits_nchw, qk_attention, vv_attention) — eval semantics."""
    assert (in_hw[0] - 1) % 8 == 0 and (in_hw[1] - 1) % 8 == 0
    h = (in_hw[0] - 1) // 8 * zoom_factor + 1
    w = (in_hw[1] - 1) // 8 * zoom_factor + 1

    B, _, Hf, Wf = feat_nchw.shape
    x = jnp.transpose(feat_nchw, (0, 2, 3, 1))               # NHWC

    # sa_in_conv: Conv3x3(bias=False) + BN(eval) + ReLU  -> (B, N, down)
    feat = conv3x3_bn_relu(x, params['in_w9'], params['in_scale'],
                           params['in_bias'])
    down = feat.shape[-1]

    # SelfAttentionBlock (torch .view row-major flattening == this N order)
    sa_out, qk_attn, vv_attn = self_attention(
        feat, params['wqkv'], params['bqkv'], params['gamma'],
        with_value_attention=with_value_attention)

    # sa_out_conv + sa_cls_seg (Dropout2d identity in eval, 1x1 conv fused)
    logits = conv3x3_bn_relu_cls(
        sa_out.reshape(B, Hf, Wf, down), params['out_w9'], params['out_scale'],
        params['out_bias'], params['cls_wt'], params['cls_b'])  # (B, cls, N)
    classes = logits.shape[1]

    if zoom_factor != 1:
        out = bilinear_upsample(logits, Hf, Wf, h, w)           # (B, cls, h, w)
    else:
        out = logits.reshape(B, classes, Hf, Wf)
    return out, qk_attn, vv_attn


# ------------------------------------------------------------------ main

if __name__ == "__main__":
    key = jax.random.PRNGKey(0)
    k_feat, k_param = jax.random.split(key)

    # Small, shape-consistent configuration (ResNet-50-style head, scaled down):
    B, fea_dim, Hf, Wf = 2, 64, 8, 8
    down_dim = fea_dim // 4          # 16 -> query/key dim = down_dim // 8 = 2
    classes = 2
    in_hw = (17, 17)                 # (17 - 1) % 8 == 0 ; zoom_factor=8 -> 17x17

    feat = jax.random.normal(k_feat, (B, fea_dim, Hf, Wf), jnp.float32)
    params = init_params(k_param, fea_dim, down_dim, classes)

    out, qk_attn, vv_attn = sanet_head_forward(feat, params, in_hw, zoom_factor=8)
    jax.block_until_ready((out, qk_attn, vv_attn))

    assert out.shape == (B, classes, 17, 17)
    assert qk_attn.shape == (B, Hf * Wf, Hf * Wf)
    assert vv_attn.shape == (B, Hf * Wf, Hf * Wf)
    print("KERNEL_OK")
</pallas_src>

<mosaic_0001>
module attributes {stable_mosaic.version = 11 : i64} {
  func.func @_conv3x3_bn_relu_kernel(%arg0: i32, %arg1: memref<1x10x10x64xbf16, #tpu.memory_space<vmem>>, %arg2: memref<576x16xbf16, #tpu.memory_space<vmem>>, %arg3: memref<1x16xf32, #tpu.memory_space<vmem>>, %arg4: memref<1x16xf32, #tpu.memory_space<vmem>>, %arg5: memref<1x64x16xf32, #tpu.memory_space<vmem>>) attributes {dimension_semantics = [#tpu.dimension_semantics<parallel>], iteration_bounds = array<i64: 2>, scalar_prefetch = 0 : i64, scratch_operands = 0 : i64, tpu.core_type = #tpu.core_type<tc>, window_params = [{transform_indices = @transform_0, window_bounds = array<i64: 1, 10, 10, 64>}, {pipeline_mode = #tpu.pipeline_mode<synchronous>, transform_indices = @transform_1, window_bounds = array<i64: 576, 16>}, {pipeline_mode = #tpu.pipeline_mode<synchronous>, transform_indices = @transform_2, window_bounds = array<i64: 1, 16>}, {pipeline_mode = #tpu.pipeline_mode<synchronous>, transform_indices = @transform_3, window_bounds = array<i64: 1, 16>}, {transform_indices = @transform_4, window_bounds = array<i64: 1, 64, 16>}]} {
    %c0 = arith.constant 0 : index
    %c0_0 = arith.constant 0 : index
    %c0_1 = arith.constant 0 : index
    %c0_2 = arith.constant 0 : index
    %0 = vector.load %arg1[%c0, %c0_0, %c0_1, %c0_2] : memref<1x10x10x64xbf16, #tpu.memory_space<vmem>>, vector<1x10x10x64xbf16>
    %1 = vector.shape_cast %0 : vector<1x10x10x64xbf16> to vector<10x10x64xbf16>
    %2 = arith.extf %1 : vector<10x10x64xbf16> to vector<10x10x64xf32>
    %3 = vector.extract_strided_slice %2 {offsets = [0, 0, 0], sizes = [8, 8, 64], strides = [1, 1, 1]} : vector<10x10x64xf32> to vector<8x8x64xf32>
    %4 = vector.shape_cast %3 : vector<8x8x64xf32> to vector<64x64xf32>
    %5 = vector.extract_strided_slice %2 {offsets = [0, 1, 0], sizes = [8, 8, 64], strides = [1, 1, 1]} : vector<10x10x64xf32> to vector<8x8x64xf32>
    %6 = vector.shape_cast %5 : vector<8x8x64xf32> to vector<64x64xf32>
    %7 = vector.extract_strided_slice %2 {offsets = [0, 2, 0], sizes = [8, 8, 64], strides = [1, 1, 1]} : vector<10x10x64xf32> to vector<8x8x64xf32>
    %8 = vector.shape_cast %7 : vector<8x8x64xf32> to vector<64x64xf32>
    %9 = vector.extract_strided_slice %2 {offsets = [1, 0, 0], sizes = [8, 8, 64], strides = [1, 1, 1]} : vector<10x10x64xf32> to vector<8x8x64xf32>
    %10 = vector.shape_cast %9 : vector<8x8x64xf32> to vector<64x64xf32>
    %11 = vector.extract_strided_slice %2 {offsets = [1, 1, 0], sizes = [8, 8, 64], strides = [1, 1, 1]} : vector<10x10x64xf32> to vector<8x8x64xf32>
    %12 = vector.shape_cast %11 : vector<8x8x64xf32> to vector<64x64xf32>
    %13 = vector.extract_strided_slice %2 {offsets = [1, 2, 0], sizes = [8, 8, 64], strides = [1, 1, 1]} : vector<10x10x64xf32> to vector<8x8x64xf32>
    %14 = vector.shape_cast %13 : vector<8x8x64xf32> to vector<64x64xf32>
    %15 = vector.extract_strided_slice %2 {offsets = [2, 0, 0], sizes = [8, 8, 64], strides = [1, 1, 1]} : vector<10x10x64xf32> to vector<8x8x64xf32>
    %16 = vector.shape_cast %15 : vector<8x8x64xf32> to vector<64x64xf32>
    %17 = vector.extract_strided_slice %2 {offsets = [2, 1, 0], sizes = [8, 8, 64], strides = [1, 1, 1]} : vector<10x10x64xf32> to vector<8x8x64xf32>
    %18 = vector.shape_cast %17 : vector<8x8x64xf32> to vector<64x64xf32>
    %19 = vector.extract_strided_slice %2 {offsets = [2, 2, 0], sizes = [8, 8, 64], strides = [1, 1, 1]} : vector<10x10x64xf32> to vector<8x8x64xf32>
    %20 = vector.shape_cast %19 : vector<8x8x64xf32> to vector<64x64xf32>
    %21 = tpu.concatenate %4, %6, %8, %10, %12, %14, %16, %18, %20 in 1 : vector<64x64xf32>, vector<64x64xf32>, vector<64x64xf32>, vector<64x64xf32>, vector<64x64xf32>, vector<64x64xf32>, vector<64x64xf32>, vector<64x64xf32>, vector<64x64xf32> -> vector<64x576xf32>
    %22 = arith.truncf %21 : vector<64x576xf32> to vector<64x576xbf16>
    %c0_3 = arith.constant 0 : index
    %c0_4 = arith.constant 0 : index
    %23 = vector.load %arg2[%c0_3, %c0_4] : memref<576x16xbf16, #tpu.memory_space<vmem>>, vector<576x16xbf16>
    %cst = arith.constant dense<0.000000e+00> : vector<64x16xf32>
    %24 = tpu.matmul %22, %23, %cst {dimension_numbers = #tpu.dot_dimension_numbers<[1], [0], [0], [1], [0, 0, 1, 1], [], []>} : vector<64x576xbf16>, vector<576x16xbf16>, vector<64x16xf32> -> vector<64x16xf32>
    %c0_5 = arith.constant 0 : index
    %c0_6 = arith.constant 0 : index
    %25 = vector.load %arg3[%c0_5, %c0_6] : memref<1x16xf32, #tpu.memory_space<vmem>>, vector<1x16xf32>
    %26 = vector.broadcast %25 : vector<1x16xf32> to vector<64x16xf32>
    %27 = arith.mulf %24, %26 : vector<64x16xf32>
    %c0_7 = arith.constant 0 : index
    %c0_8 = arith.constant 0 : index
    %28 = vector.load %arg4[%c0_7, %c0_8] : memref<1x16xf32, #tpu.memory_space<vmem>>, vector<1x16xf32>
    %29 = vector.broadcast %28 : vector<1x16xf32> to vector<64x16xf32>
    %30 = arith.addf %27, %29 : vector<64x16xf32>
    %cst_9 = arith.constant 0.000000e+00 : f32
    %31 = vector.broadcast %cst_9 : f32 to vector<64x16xf32>
    %32 = arith.maximumf %30, %31 : vector<64x16xf32>
    %c0_10 = arith.constant 0 : index
    %c0_11 = arith.constant 0 : index
    %c0_12 = arith.constant 0 : index
    %33 = vector.load %arg5[%c0_10, %c0_11, %c0_12] : memref<1x64x16xf32, #tpu.memory_space<vmem>>, vector<1x64x16xf32>
    %34 = vector.shape_cast %33 : vector<1x64x16xf32> to vector<64x16xf32>
    %35 = vector.shape_cast %32 : vector<64x16xf32> to vector<1x64x16xf32>
    tpu.vector_store %arg5[%c0_10, %c0_11, %c0_12], %35 {strides = array<i32>} : memref<1x64x16xf32, #tpu.memory_space<vmem>>, vector<1x64x16xf32>,
    return
  }
  func.func @transform_0(%arg0: i32) -> (i32, i32, i32, i32) {
    %c0_i32 = arith.constant 0 : i32
    %c0_i32_0 = arith.constant 0 : i32
    %c0_i32_1 = arith.constant 0 : i32
    %c0_i32_2 = arith.constant 0 : i32
    return %arg0, %c0_i32, %c0_i32_0, %c0_i32_1 : i32, i32, i32, i32
  }
  func.func @transform_1(%arg0: i32) -> (i32, i32) {
    %c0_i32 = arith.constant 0 : i32
    %c0_i32_0 = arith.constant 0 : i32
    %c0_i32_1 = arith.constant 0 : i32
    return %c0_i32, %c0_i32_0 : i32, i32
  }
  func.func @transform_2(%arg0: i32) -> (i32, i32) {
    %c0_i32 = arith.constant 0 : i32
    %c0_i32_0 = arith.constant 0 : i32
    %c0_i32_1 = arith.constant 0 : i32
    return %c0_i32, %c0_i32_0 : i32, i32
  }
  func.func @transform_3(%arg0: i32) -> (i32, i32) {
    %c0_i32 = arith.constant 0 : i32
    %c0_i32_0 = arith.constant 0 : i32
    %c0_i32_1 = arith.constant 0 : i32
    return %c0_i32, %c0_i32_0 : i32, i32
  }
  func.func @transform_4(%arg0: i32) -> (i32, i32, i32) {
    %c0_i32 = arith.constant 0 : i32
    %c0_i32_0 = arith.constant 0 : i32
    %c0_i32_1 = arith.constant 0 : i32
    return %arg0, %c0_i32, %c0_i32_0 : i32, i32, i32
  }
}

</mosaic_0001>

<llo_original>
// kernel: tpu_custom_call.1
$region0: #{tpu_custom_call.1}
  #allocation0 [shape = 'u32[]', space=smem, size = 0x4, offset = 0x4, fixed_abs, tag = 'smem constant byte address 0x4 - core index']
  #allocation1 [shape = 'u32[144,128]{1,0:T(1,128)}', space=vmem, size = 0x12000, scoped, tag = 'internal scratch']
  %s0 = inlined_call_operand.vmem [shape: bf16[2,10,10,64], index: 0, kind: input, shape index: {}]
  %s1 = inlined_call_operand.vmem [shape: bf16[576,16], index: 1, kind: input, shape index: {}]
  %s2 = inlined_call_operand.vmem [shape: f32[1,16], index: 2, kind: input, shape index: {}]
  %s3 = inlined_call_operand.vmem [shape: f32[1,16], index: 3, kind: input, shape index: {}]
  %s4 = inlined_call_operand.vmem [shape: f32[2,64,16], index: 4, kind: output, shape index: {}]
  %s5 = sld [smem:[#allocation0]]
  $region49: #{tpu_custom_call.1} parent=0
    _
  %s7 = ssub.s32 1, %s5
  %s8 = scalar_select 0, %s7, %s5
  loop: start=0, step=1, limit=4
  $region2: #{tpu_custom_call.1} parent=0 // loop_pre_header
    _
  $region3: #{tpu_custom_call.1} parent=0 // loop_header
    %s10 = sphi 0, %s14
    %p11 = scmp.ge.s32.totalorder %s10, 4
    %s20 = sphi 0, %s22
    %s23 = sphi 0, %s20
    %s24 = sphi 0, %s23
    %s40 = sphi 0, %s24
    %s44 = sphi 0, %s44
    %s46 = sphi 0, %s44
    %s47 = sphi 0, %s46
    %s61 = sphi 0, %s47
    %s65 = sphi 0, %s65
    %s67 = sphi 0, %s65
    %s68 = sphi 0, %s67
    %s82 = sphi 0, %s68
    %s86 = sphi 0, %s86
    %s88 = sphi 0, %s86
    %s89 = sphi 0, %s88
    %s103 = sphi 0, %s89
    %s109 = sphi 0, %s111
    %s112 = sphi 0, %s109
    %s113 = sphi 0, %s112
    %s129 = sphi 0, %s113
  $region4: #{tpu_custom_call.1} parent=0 // loop_header_branch
    %13 = sbr.rel (%p11) target = $region8
  $region5: #{tpu_custom_call.1} parent=0 // loop_body
    %s15 = ssub.s32 %s10, 1
    %s16 = ssub.s32 %s10, 2
    %s17 = sadd.s32 %s10, 1
    %s18 = ssub.s32 %s10, %s17
    %p19 = scmp.eq.s32.totalorder %s18, 0
    %s21 = sadd.s32 %s20, 1
    %s22 = scalar_select %p19, %s20, %s21
    %p25 = pneg %p19
    %p26 = scmp.eq.s32.totalorder %s10, 1
    %p27 = por %p25, %p26
    %p28 = scmp.ne.s32.totalorder %s20, %s23
    %p29 = scmp.eq.s32.totalorder %s10, 0
    %p30 = por %p28, %p29
    %p31 = scmp.ne.s32.totalorder %s20, %s23
    %p32 = scmp.eq.s32.totalorder %s15, 1
    %p33 = por %p31, %p32
    %p34 = scmp.ne.s32.totalorder %s23, %s24
    %p35 = scmp.eq.s32.totalorder %s15, 0
    %p36 = por %p34, %p35
    %p37 = scmp.ne.s32.totalorder %s23, %s24
    %p38 = scmp.eq.s32.totalorder %s16, 1
    %p39 = por %p37, %p38
    %p41 = scmp.ne.s32.totalorder %s24, %s40
    %p42 = scmp.eq.s32.totalorder %s16, 0
    %p43 = por %p41, %p42
    %s45 = sadd.s32 %s44, 1
    %p48 = scmp.eq.s32.totalorder %s10, 1
    %p49 = scmp.ne.s32.totalorder %s44, %s46
    %p50 = scmp.eq.s32.totalorder %s10, 0
    %p51 = por %p49, %p50
    %p52 = scmp.ne.s32.totalorder %s44, %s46
    %p53 = scmp.eq.s32.totalorder %s15, 1
    %p54 = por %p52, %p53
    %p55 = scmp.ne.s32.totalorder %s46, %s47
    %p56 = scmp.eq.s32.totalorder %s15, 0
    %p57 = por %p55, %p56
    %p58 = scmp.ne.s32.totalorder %s46, %s47
    %p59 = scmp.eq.s32.totalorder %s16, 1
    %p60 = por %p58, %p59
    %p62 = scmp.ne.s32.totalorder %s47, %s61
    %p63 = scmp.eq.s32.totalorder %s16, 0
    %p64 = por %p62, %p63
    %s66 = sadd.s32 %s65, 1
    %p69 = scmp.eq.s32.totalorder %s10, 1
    %p70 = scmp.ne.s32.totalorder %s65, %s67
    %p71 = scmp.eq.s32.totalorder %s10, 0
    %p72 = por %p70, %p71
    %p73 = scmp.ne.s32.totalorder %s65, %s67
    %p74 = scmp.eq.s32.totalorder %s15, 1
    %p75 = por %p73, %p74
    %p76 = scmp.ne.s32.totalorder %s67, %s68
    %p77 = scmp.eq.s32.totalorder %s15, 0
    %p78 = por %p76, %p77
    %p79 = scmp.ne.s32.totalorder %s67, %s68
    %p80 = scmp.eq.s32.totalorder %s16, 1
    %p81 = por %p79, %p80
    %p83 = scmp.ne.s32.totalorder %s68, %s82
    %p84 = scmp.eq.s32.totalorder %s16, 0
    %p85 = por %p83, %p84
    %s87 = sadd.s32 %s86, 1
    %p90 = scmp.eq.s32.totalorder %s10, 1
    %p91 = scmp.ne.s32.totalorder %s86, %s88
    %p92 = scmp.eq.s32.totalorder %s10, 0
    %p93 = por %p91, %p92
    %p94 = scmp.ne.s32.totalorder %s86, %s88
    %p95 = scmp.eq.s32.totalorder %s15, 1
    %p96 = por %p94, %p95
    %p97 = scmp.ne.s32.totalorder %s88, %s89
    %p98 = scmp.eq.s32.totalorder %s15, 0
    %p99 = por %p97, %p98
    %p100 = scmp.ne.s32.totalorder %s88, %s89
    %p101 = scmp.eq.s32.totalorder %s16, 1
    %p102 = por %p100, %p101
    %p104 = scmp.ne.s32.totalorder %s89, %s103
    %p105 = scmp.eq.s32.totalorder %s16, 0
    %p106 = por %p104, %p105
    %s107 = ssub.s32 %s10, %s17
    %p108 = scmp.eq.s32.totalorder %s107, 0
    %s110 = sadd.s32 %s109, 1
    %s111 = scalar_select %p108, %s109, %s110
    %p114 = pneg %p108
    %p115 = scmp.eq.s32.totalorder %s10, 1
    %p116 = por %p114, %p115
    %p117 = scmp.ne.s32.totalorder %s109, %s112
    %p118 = scmp.eq.s32.totalorder %s10, 0
    %p119 = por %p117, %p118
    %p120 = scmp.ne.s32.totalorder %s109, %s112
    %p121 = scmp.eq.s32.totalorder %s15, 1
    %p122 = por %p120, %p121
    %p123 = scmp.ne.s32.totalorder %s112, %s113
    %p124 = scmp.eq.s32.totalorder %s15, 0
    %p125 = por %p123, %p124
    %p126 = scmp.ne.s32.totalorder %s112, %s113
    %p127 = scmp.eq.s32.totalorder %s16, 1
    %p128 = por %p126, %p127
    %p130 = scmp.ne.s32.totalorder %s113, %s129
    %p131 = scmp.eq.s32.totalorder %s16, 0
    %p132 = por %p130, %p131
    %p133 = scmp.le.s32.totalorder 1, %s10
    %p134 = scmp.lt.s32.totalorder %s10, 3
    %p135 = pnand %p133, %p134
    %p136 = pneg %p135
    // Predicated region
    $region9: #{tpu_custom_call.1} parent=5 // pred_check
      _
    $region10: #{tpu_custom_call.1} parent=5 // pred_check_branch
      %138 = sbr.rel (%p135) target = $region12
    $region11: #{tpu_custom_call.1} parent=5 // pred_region
      %s139 = ssub.s32 %s10, 1
      // Predicated region
      $region13: #{tpu_custom_call.1} parent=11 // pred_check
        %p140 = pneg %p57
      $region14: #{tpu_custom_call.1} parent=11 // pred_check_branch
        %142 = sbr.rel (%p140) target = $region16
      $region15: #{tpu_custom_call.1} parent=11 // pred_region
        _
      $region16: #{tpu_custom_call.1} parent=11 // pred_fallthru
        _
      // Predicated region
      $region17: #{tpu_custom_call.1} parent=11 // pred_check
        %p143 = pneg %p78
      $region18: #{tpu_custom_call.1} parent=11 // pred_check_branch
        %145 = sbr.rel (%p143) target = $region20
      $region19: #{tpu_custom_call.1} parent=11 // pred_region
        _
      $region20: #{tpu_custom_call.1} parent=11 // pred_fallthru
        _
      // Predicated region
      $region21: #{tpu_custom_call.1} parent=11 // pred_check
        %p146 = pneg %p99
      $region22: #{tpu_custom_call.1} parent=11 // pred_check_branch
        %148 = sbr.rel (%p146) target = $region24
      $region23: #{tpu_custom_call.1} parent=11 // pred_region
        _
      $region24: #{tpu_custom_call.1} parent=11 // pred_fallthru
        _
    $region12: #{tpu_custom_call.1} parent=5 // pred_fallthru
      _
    %p149 = scmp.lt.s32.totalorder %s10, 2
    // Predicated region
    $region25: #{tpu_custom_call.1} parent=5 // pred_check
      %p150 = pneg %p149
    $region26: #{tpu_custom_call.1} parent=5 // pred_check_branch
      %152 = sbr.rel (%p150) target = $region28
    $region27: #{tpu_custom_call.1} parent=5 // pred_region
      // Predicated region
      $region29: #{tpu_custom_call.1} parent=27 // pred_check
        %p153 = pneg %p30
      $region30: #{tpu_custom_call.1} parent=27 // pred_check_branch
        %155 = sbr.rel (%p153) target = $region32
      $region31: #{tpu_custom_call.1} parent=27 // pred_region
        %p156 = scmp.lt.s32.totalorder %s10, 1
        %s157 = scalar_select %p156, %s10, 1
        %s158 = smul.addr %s157, 20
        %s159 = smul.addr %s158, 4
        %s160 = scalar_lea.vmem %s0, %s159
      $region32: #{tpu_custom_call.1} parent=27 // pred_fallthru
        _
    $region28: #{tpu_custom_call.1} parent=5 // pred_fallthru
      _
    %p161 = scmp.le.s32.totalorder 1, %s10
    %p162 = scmp.lt.s32.totalorder %s10, 3
    %p163 = pnand %p161, %p162
    %p164 = pneg %p163
    // Predicated region
    $region33: #{tpu_custom_call.1} parent=5 // pred_check
      _
    $region34: #{tpu_custom_call.1} parent=5 // pred_check_branch
      %166 = sbr.rel (%p163) target = $region36
    $region35: #{tpu_custom_call.1} parent=5 // pred_region
      %s167 = ssub.s32 %s10, 1
      %p168 = scmp.lt.s32.totalorder %s15, 1
      %s169 = scalar_select %p168, %s15, 1
      %s170 = smul.addr %s169, 20
      %s171 = smul.addr %s170, 4
      %s172 = scalar_lea.vmem %s0, %s171
      %p173 = pneg %p36
      %p174 = pneg %p33
      %p175 = pneg %p57
      %p176 = pneg %p54
      %p177 = pneg %p78
      %p178 = pneg %p75
      %p179 = pneg %p99
      %p180 = pneg %p96
      %p181 = pneg %p125
      %p182 = pneg %p122
      %p183 = scmp.lt.s32.totalorder %s15, 1
      %s184 = scalar_select %p183, %s15, 1
      %s185 = smul.addr %s184, 8
      %s186 = smul.addr %s185, 8
      %s187 = scalar_lea.vmem %s4, %s186
      %p188 = scmp.lt.s32.totalorder %s15, 1
      %s189 = scalar_select %p188, %s15, 1
      %s190 = smul.addr %s189, 20
      %s191 = smul.addr %s190, 4
      %s192 = scalar_lea.vmem %s0, %s191
      %p193 = scmp.lt.s32.totalorder %s15, 1
      %s194 = scalar_select %p193, %s15, 1
      %s195 = smul.addr %s194, 8
      %s196 = smul.addr %s195, 8
      %s197 = scalar_lea.vmem %s4, %s196
      %v199 = vld [vmem:[%s192] sm:$0xf]
      %v200 = vld [vmem:[%s192 + $0x4] sm:$0x1]
      %v201 = vld [vmem:[%s192 + $0x8] sm:$0xf]
      %v202 = vld [vmem:[%s192 + $0xc] sm:$0x1]
      %v203 = vld [vmem:[%s192 + $0x10] sm:$0xf]
      %v204 = vld [vmem:[%s192 + $0x14] sm:$0x1]
      %v205 = vld [vmem:[%s192 + $0x18] sm:$0xf]
      %v206 = vld [vmem:[%s192 + $0x1c] sm:$0x1]
      %v207 = vld [vmem:[%s192 + $0x20] sm:$0xf]
      %v208 = vld [vmem:[%s192 + $0x24] sm:$0x1]
      %v209 = vld [vmem:[%s192 + $0x28] sm:$0xf]
      %v210 = vld [vmem:[%s192 + $0x2c] sm:$0x1]
      %v211 = vld [vmem:[%s192 + $0x30] sm:$0xf]
      %v212 = vld [vmem:[%s192 + $0x34] sm:$0x1]
      %v213 = vld [vmem:[%s192 + $0x38] sm:$0xf]
      %v214 = vld [vmem:[%s192 + $0x3c] sm:$0x1]
      %v215 = vld [vmem:[%s192 + $0x40] sm:$0xf]
      %v216 = vld [vmem:[%s192 + $0x44] sm:$0x1]
      %v217 = vld [vmem:[%s192 + $0x48] sm:$0xf]
      %v218 = vld [vmem:[%s192 + $0x4c] sm:$0x1]
      %v219 = vunpack.c.l.bf16 %v199
      %v220 = vunpack.c.l.bf16 %v200
      %v221 = vunpack.c.l.bf16 %v201
      %v222 = vunpack.c.l.bf16 %v202
      %v223 = vunpack.c.l.bf16 %v203
      %v224 = vunpack.c.l.bf16 %v204
      %v225 = vunpack.c.l.bf16 %v205
      %v226 = vunpack.c.l.bf16 %v206
      %v227 = vunpack.c.l.bf16 %v207
      %v228 = vunpack.c.l.bf16 %v208
      %v229 = vunpack.c.l.bf16 %v209
      %v230 = vunpack.c.l.bf16 %v210
      %v231 = vunpack.c.l.bf16 %v211
      %v232 = vunpack.c.l.bf16 %v212
      %v233 = vunpack.c.l.bf16 %v213
      %v234 = vunpack.c.l.bf16 %v214
      %v235 = vunpack.c.l.bf16 %v215
      %v236 = vunpack.c.l.bf16 %v216
      %v237 = vunpack.c.l.bf16 %v217
      %v238 = vunpack.c.l.bf16 %v218
      %vm255 = vcmask 1046528
      %v256 = vrot.slane %v219, 1
      %v257 = vrot.slane %v220, 1
      %v258 = vsel %vm255, %v256, %v257
      %v259 = vrot.slane %v221, 1
      %v260 = vrot.slane %v222, 1
      %v261 = vsel %vm255, %v259, %v260
      %v262 = vrot.slane %v223, 1
      %v263 = vrot.slane %v224, 1
      %v264 = vsel %vm255, %v262, %v263
      %v265 = vrot.slane %v225, 1
      %v266 = vrot.slane %v226, 1
      %v267 = vsel %vm255, %v265, %v266
      %v268 = vrot.slane %v227, 1
      %v269 = vrot.slane %v228, 1
      %v270 = vsel %vm255, %v268, %v269
      %v271 = vrot.slane %v229, 1
      %v272 = vrot.slane %v230, 1
      %v273 = vsel %vm255, %v271, %v272
      %v274 = vrot.slane %v231, 1
      %v275 = vrot.slane %v232, 1
      %v276 = vsel %vm255, %v274, %v275
      %v277 = vrot.slane %v233, 1
      %v278 = vrot.slane %v234, 1
      %v279 = vsel %vm255, %v277, %v278
      %vm280 = vcmask 1045504
      %v281 = vrot.slane %v219, 2
      %v282 = vrot.slane %v220, 2
      %v283 = vsel %vm280, %v281, %v282
      %v284 = vrot.slane %v221, 2
      %v285 = vrot.slane %v222, 2
      %v286 = vsel %vm280, %v284, %v285
      %v287 = vrot.slane %v223, 2
      %v288 = vrot.slane %v224, 2
      %v289 = vsel %vm280, %v287, %v288
      %v290 = vrot.slane %v225, 2
      %v291 = vrot.slane %v226, 2
      %v292 = vsel %vm280, %v290, %v291
      %v293 = vrot.slane %v227, 2
      %v294 = vrot.slane %v228, 2
      %v295 = vsel %vm280, %v293, %v294
      %v296 = vrot.slane %v229, 2
      %v297 = vrot.slane %v230, 2
      %v298 = vsel %vm280, %v296, %v297
      %v299 = vrot.slane %v231, 2
      %v300 = vrot.slane %v232, 2
      %v301 = vsel %vm280, %v299, %v300
      %v302 = vrot.slane %v233, 2
      %v303 = vrot.slane %v234, 2
      %v304 = vsel %vm280, %v302, %v303
      %v315 = vrot.slane %v235, 1
      %v316 = vrot.slane %v236, 1
      %v317 = vsel %vm255, %v315, %v316
      %v326 = vrot.slane %v235, 2
      %v327 = vrot.slane %v236, 2
      %v328 = vsel %vm280, %v326, %v327
      %v331 = vrot.slane %v237, 1
      %v332 = vrot.slane %v238, 1
      %v333 = vsel %vm255, %v331, %v332
      %v334 = vrot.slane %v237, 2
      %v335 = vrot.slane %v238, 2
      %v336 = vsel %vm280, %v334, %v335
      %339 = vrot.lane.b32.xlu0 %v258, 64
      %v340 = vpop.permute.xlu0 %339
      %341 = vrot.lane.b32.xlu0 %v261, 64
      %v342 = vpop.permute.xlu0 %341
      %343 = vrot.lane.b32.xlu0 %v264, 64
      %v344 = vpop.permute.xlu0 %343
      %345 = vrot.lane.b32.xlu0 %v267, 64
      %v346 = vpop.permute.xlu0 %345
      %347 = vrot.lane.b32.xlu0 %v270, 64
      %v348 = vpop.permute.xlu0 %347
      %349 = vrot.lane.b32.xlu0 %v273, 64
      %v350 = vpop.permute.xlu0 %349
      %351 = vrot.lane.b32.xlu0 %v276, 64
      %v352 = vpop.permute.xlu0 %351
      %353 = vrot.lane.b32.xlu0 %v279, 64
      %v354 = vpop.permute.xlu0 %353
      %363 = vrot.lane.b32.xlu0 %v221, 64
      %v364 = vpop.permute.xlu0 %363
      %365 = vrot.lane.b32.xlu0 %v223, 64
      %v366 = vpop.permute.xlu0 %365
      %367 = vrot.lane.b32.xlu0 %v225, 64
      %v368 = vpop.permute.xlu0 %367
      %369 = vrot.lane.b32.xlu0 %v227, 64
      %v370 = vpop.permute.xlu0 %369
      %371 = vrot.lane.b32.xlu0 %v229, 64
      %v372 = vpop.permute.xlu0 %371
      %373 = vrot.lane.b32.xlu0 %v231, 64
      %v374 = vpop.permute.xlu0 %373
      %375 = vrot.lane.b32.xlu0 %v233, 64
      %v376 = vpop.permute.xlu0 %375
      %377 = vrot.lane.b32.xlu0 %v235, 64
      %v378 = vpop.permute.xlu0 %377
      %387 = vrot.lane.b32.xlu0 %v286, 64
      %v388 = vpop.permute.xlu0 %387
      %389 = vrot.lane.b32.xlu0 %v289, 64
      %v390 = vpop.permute.xlu0 %389
      %391 = vrot.lane.b32.xlu0 %v292, 64
      %v392 = vpop.permute.xlu0 %391
      %393 = vrot.lane.b32.xlu0 %v295, 64
      %v394 = vpop.permute.xlu0 %393
      %395 = vrot.lane.b32.xlu0 %v298, 64
      %v396 = vpop.permute.xlu0 %395
      %397 = vrot.lane.b32.xlu0 %v301, 64
      %v398 = vpop.permute.xlu0 %397
      %399 = vrot.lane.b32.xlu0 %v304, 64
      %v400 = vpop.permute.xlu0 %399
      %401 = vrot.lane.b32.xlu0 %v328, 64
      %v402 = vpop.permute.xlu0 %401
      %411 = vrot.lane.b32.xlu0 %v317, 64
      %v412 = vpop.permute.xlu0 %411
      %413 = vrot.lane.b32.xlu0 %v333, 64
      %v414 = vpop.permute.xlu0 %413
      %vm417 = vcmask 523264
      %v418 = vsel %vm417, %v219, %v340
      %v419 = vsel %vm417, %v221, %v342
      %v420 = vsel %vm417, %v223, %v344
      %v421 = vsel %vm417, %v225, %v346
      %v422 = vsel %vm417, %v227, %v348
      %v423 = vsel %vm417, %v229, %v350
      %v424 = vsel %vm417, %v231, %v352
      %v425 = vsel %vm417, %v233, %v354
      %v426 = vsel %vm417, %v283, %v364
      %v427 = vsel %vm417, %v286, %v366
      %v428 = vsel %vm417, %v289, %v368
      %v429 = vsel %vm417, %v292, %v370
      %v430 = vsel %vm417, %v295, %v372
      %v431 = vsel %vm417, %v298, %v374
      %v432 = vsel %vm417, %v301, %v376
      %v433 = vsel %vm417, %v304, %v378
      %v434 = vsel %vm417, %v261, %v388
      %v435 = vsel %vm417, %v264, %v390
      %v436 = vsel %vm417, %v267, %v392
      %v437 = vsel %vm417, %v270, %v394
      %v438 = vsel %vm417, %v273, %v396
      %v439 = vsel %vm417, %v276, %v398
      %v440 = vsel %vm417, %v279, %v400
      %v441 = vsel %vm417, %v317, %v402
      %v442 = vsel %vm417, %v235, %v412
      %v443 = vsel %vm417, %v237, %v414
      %v444 = vpack.c.bf16 %v419, %v418
      %v445 = vpack.c.bf16 %v427, %v426
      %v446 = vpack.c.bf16 %v435, %v434
      %v447 = vpack.c.bf16 %v421, %v420
      %v448 = vpack.c.bf16 %v292, %v289
      %v449 = vpack.c.bf16 %v429, %v428
      %v450 = vpack.c.bf16 %v437, %v436
      %v451 = vpack.c.bf16 %v423, %v422
      %v452 = vpack.c.bf16 %v298, %v295
      %v453 = vpack.c.bf16 %v431, %v430
      %v454 = vpack.c.bf16 %v439, %v438
      %v455 = vpack.c.bf16 %v425, %v424
      %v456 = vpack.c.bf16 %v304, %v301
      %v457 = vpack.c.bf16 %v433, %v432
      %v458 = vpack.c.bf16 %v441, %v440
      %v459 = vpack.c.bf16 %v443, %v442
      %v460 = vpack.c.bf16 %v336, %v328
      %v461 = vld [vmem:[%s1] sm:$0xf]
      %v462 = vld [vmem:[%s1 + $0x4] sm:$0xf]
      %v463 = vld [vmem:[%s1 + $0x8] sm:$0xf]
      %v464 = vld [vmem:[%s1 + $0xc] sm:$0xf]
      %v465 = vld [vmem:[%s1 + $0x10] sm:$0xf]
      %v466 = vld [vmem:[%s1 + $0x14] sm:$0xf]
      %v467 = vld [vmem:[%s1 + $0x18] sm:$0xf]
      %v468 = vld [vmem:[%s1 + $0x1c] sm:$0xf]
      %v469 = vld [vmem:[%s1 + $0x20] sm:$0xf]
      %v470 = vld [vmem:[%s1 + $0x24] sm:$0xf]
      %v471 = vld [vmem:[%s1 + $0x28] sm:$0xf]
      %v472 = vld [vmem:[%s1 + $0x2c] sm:$0xf]
      %v473 = vld [vmem:[%s1 + $0x30] sm:$0xf]
      %v474 = vld [vmem:[%s1 + $0x34] sm:$0xf]
      %v475 = vld [vmem:[%s1 + $0x38] sm:$0xf]
      %v476 = vld [vmem:[%s1 + $0x3c] sm:$0xf]
      %v477 = vld [vmem:[%s1 + $0x40] sm:$0xf]
      %v478 = vld [vmem:[%s1 + $0x44] sm:$0xf]
      %v479 = vld [vmem:[%s1 + $0x48] sm:$0xf]
      %v480 = vld [vmem:[%s1 + $0x4c] sm:$0xf]
      %v481 = vld [vmem:[%s1 + $0x50] sm:$0xf]
      %v482 = vld [vmem:[%s1 + $0x54] sm:$0xf]
      %v483 = vld [vmem:[%s1 + $0x58] sm:$0xf]
      %v484 = vld [vmem:[%s1 + $0x5c] sm:$0xf]
      %v485 = vld [vmem:[%s1 + $0x60] sm:$0xf]
      %v486 = vld [vmem:[%s1 + $0x64] sm:$0xf]
      %v487 = vld [vmem:[%s1 + $0x68] sm:$0xf]
      %v488 = vld [vmem:[%s1 + $0x6c] sm:$0xf]
      %v489 = vld [vmem:[%s1 + $0x70] sm:$0xf]
      %v490 = vld [vmem:[%s1 + $0x74] sm:$0xf]
      %v491 = vld [vmem:[%s1 + $0x78] sm:$0xf]
      %v492 = vld [vmem:[%s1 + $0x7c] sm:$0xf]
      %v493 = vld [vmem:[%s1 + $0x80] sm:$0xf]
      %v494 = vld [vmem:[%s1 + $0x84] sm:$0xf]
      %v495 = vld [vmem:[%s1 + $0x88] sm:$0xf]
      %v496 = vld [vmem:[%s1 + $0x8c] sm:$0xf]
      %v497 = vld [vmem:[%s1 + $0x90] sm:$0xf]
      %v498 = vld [vmem:[%s1 + $0x94] sm:$0xf]
      %v499 = vld [vmem:[%s1 + $0x98] sm:$0xf]
      %v500 = vld [vmem:[%s1 + $0x9c] sm:$0xf]
      %v501 = vld [vmem:[%s1 + $0xa0] sm:$0xf]
      %v502 = vld [vmem:[%s1 + $0xa4] sm:$0xf]
      %v503 = vld [vmem:[%s1 + $0xa8] sm:$0xf]
      %v504 = vld [vmem:[%s1 + $0xac] sm:$0xf]
      %v505 = vld [vmem:[%s1 + $0xb0] sm:$0xf]
      %v506 = vld [vmem:[%s1 + $0xb4] sm:$0xf]
      %v507 = vld [vmem:[%s1 + $0xb8] sm:$0xf]
      %v508 = vld [vmem:[%s1 + $0xbc] sm:$0xf]
      %v509 = vld [vmem:[%s1 + $0xc0] sm:$0xf]
      %v510 = vld [vmem:[%s1 + $0xc4] sm:$0xf]
      %v511 = vld [vmem:[%s1 + $0xc8] sm:$0xf]
      %v512 = vld [vmem:[%s1 + $0xcc] sm:$0xf]
      %v513 = vld [vmem:[%s1 + $0xd0] sm:$0xf]
      %v514 = vld [vmem:[%s1 + $0xd4] sm:$0xf]
      %v515 = vld [vmem:[%s1 + $0xd8] sm:$0xf]
      %v516 = vld [vmem:[%s1 + $0xdc] sm:$0xf]
      %v517 = vld [vmem:[%s1 + $0xe0] sm:$0xf]
      %v518 = vld [vmem:[%s1 + $0xe4] sm:$0xf]
      %v519 = vld [vmem:[%s1 + $0xe8] sm:$0xf]
      %v520 = vld [vmem:[%s1 + $0xec] sm:$0xf]
      %v521 = vld [vmem:[%s1 + $0xf0] sm:$0xf]
      %v522 = vld [vmem:[%s1 + $0xf4] sm:$0xf]
      %v523 = vld [vmem:[%s1 + $0xf8] sm:$0xf]
      %v524 = vld [vmem:[%s1 + $0xfc] sm:$0xf]
      %v525 = vld [vmem:[%s1 + $0x100] sm:$0xf]
      %v526 = vld [vmem:[%s1 + $0x104] sm:$0xf]
      %v527 = vld [vmem:[%s1 + $0x108] sm:$0xf]
      %v528 = vld [vmem:[%s1 + $0x10c] sm:$0xf]
      %v529 = vld [vmem:[%s1 + $0x110] sm:$0xf]
      %v530 = vld [vmem:[%s1 + $0x114] sm:$0xf]
      %v531 = vld [vmem:[%s1 + $0x118] sm:$0xf]
      %v532 = vld [vmem:[%s1 + $0x11c] sm:$0xf]
      %v605 = vunpack.c.l.b16 %v461
      %v606 = vunpack.c.l.b16 %v462
      %v607 = vunpack.c.l.b16 %v463
      %v608 = vunpack.c.l.b16 %v464
      %v609 = vunpack.c.l.b16 %v465
      %v610 = vunpack.c.l.b16 %v466
      %v611 = vunpack.c.l.b16 %v467
      %v612 = vunpack.c.l.b16 %v468
      %v613 = vunpack.c.l.b16 %v469
      %v614 = vunpack.c.l.b16 %v470
      %v615 = vunpack.c.l.b16 %v471
      %v616 = vunpack.c.l.b16 %v472
      %v617 = vunpack.c.l.b16 %v473
      %v618 = vunpack.c.l.b16 %v474
      %v619 = vunpack.c.l.b16 %v475
      %v620 = vunpack.c.l.b16 %v476
      %v621 = vunpack.c.l.b16 %v477
      %v622 = vunpack.c.l.b16 %v478
      %v623 = vunpack.c.l.b16 %v479
      %v624 = vunpack.c.l.b16 %v480
      %v625 = vunpack.c.l.b16 %v481
      %v626 = vunpack.c.l.b16 %v482
      %v627 = vunpack.c.l.b16 %v483
      %v628 = vunpack.c.l.b16 %v484
      %v629 = vunpack.c.l.b16 %v485
      %v630 = vunpack.c.l.b16 %v486
      %v631 = vunpack.c.l.b16 %v487
      %v632 = vunpack.c.l.b16 %v488
      %v633 = vunpack.c.l.b16 %v489
      %v634 = vunpack.c.l.b16 %v490
      %v635 = vunpack.c.l.b16 %v491
      %v636 = vunpack.c.l.b16 %v492
      %v637 = vunpack.c.l.b16 %v493
      %v638 = vunpack.c.l.b16 %v494
      %v639 = vunpack.c.l.b16 %v495
      %v640 = vunpack.c.l.b16 %v496
      %v641 = vunpack.c.l.b16 %v497
      %v642 = vunpack.c.l.b16 %v498
      %v643 = vunpack.c.l.b16 %v499
      %v644 = vunpack.c.l.b16 %v500
      %v645 = vunpack.c.l.b16 %v501
      %v646 = vunpack.c.l.b16 %v502
      %v647 = vunpack.c.l.b16 %v503
      %v648 = vunpack.c.l.b16 %v504
      %v649 = vunpack.c.l.b16 %v505
      %v650 = vunpack.c.l.b16 %v506
      %v651 = vunpack.c.l.b16 %v507
      %v652 = vunpack.c.l.b16 %v508
      %v653 = vunpack.c.l.b16 %v509
      %v654 = vunpack.c.l.b16 %v510
      %v655 = vunpack.c.l.b16 %v511
      %v656 = vunpack.c.l.b16 %v512
      %v657 = vunpack.c.l.b16 %v513
      %v658 = vunpack.c.l.b16 %v514
      %v659 = vunpack.c.l.b16 %v515
      %v660 = vunpack.c.l.b16 %v516
      %v661 = vunpack.c.l.b16 %v517
      %v662 = vunpack.c.l.b16 %v518
      %v663 = vunpack.c.l.b16 %v519
      %v664 = vunpack.c.l.b16 %v520
      %v665 = vunpack.c.l.b16 %v521
      %v666 = vunpack.c.l.b16 %v522
      %v667 = vunpack.c.l.b16 %v523
      %v668 = vunpack.c.l.b16 %v524
      %v669 = vunpack.c.l.b16 %v525
      %v670 = vunpack.c.l.b16 %v526
      %v671 = vunpack.c.l.b16 %v527
      %v672 = vunpack.c.l.b16 %v528
      %v673 = vunpack.c.l.b16 %v529
      %v674 = vunpack.c.l.b16 %v530
      %v675 = vunpack.c.l.b16 %v531
      %v676 = vunpack.c.l.b16 %v532
      %v677 = vpack.c.b16 %v606, %v605
      %v678 = vpack.c.b16 %v608, %v607
      %v679 = vpack.c.b16 %v610, %v609
      %v680 = vpack.c.b16 %v612, %v611
      %v681 = vpack.c.b16 %v614, %v613
      %v682 = vpack.c.b16 %v616, %v615
      %v683 = vpack.c.b16 %v618, %v617
      %v684 = vpack.c.b16 %v620, %v619
      %v685 = vpack.c.b16 %v622, %v621
      %v686 = vpack.c.b16 %v624, %v623
      %v687 = vpack.c.b16 %v626, %v625
      %v688 = vpack.c.b16 %v628, %v627
      %v689 = vpack.c.b16 %v630, %v629
      %v690 = vpack.c.b16 %v632, %v631
      %v691 = vpack.c.b16 %v634, %v633
      %v692 = vpack.c.b16 %v636, %v635
      %v693 = vpack.c.b16 %v638, %v637
      %v694 = vpack.c.b16 %v640, %v639
      %v695 = vpack.c.b16 %v642, %v641
      %v696 = vpack.c.b16 %v644, %v643
      %v697 = vpack.c.b16 %v646, %v645
      %v698 = vpack.c.b16 %v648, %v647
      %v699 = vpack.c.b16 %v650, %v649
      %v700 = vpack.c.b16 %v652, %v651
      %v701 = vpack.c.b16 %v654, %v653
      %v702 = vpack.c.b16 %v656, %v655
      %v703 = vpack.c.b16 %v658, %v657
      %v704 = vpack.c.b16 %v660, %v659
      %v705 = vpack.c.b16 %v662, %v661
      %v706 = vpack.c.b16 %v664, %v663
      %v707 = vpack.c.b16 %v666, %v665
      %v708 = vpack.c.b16 %v668, %v667
      %v709 = vpack.c.b16 %v670, %v669
      %v710 = vpack.c.b16 %v672, %v671
      %v711 = vpack.c.b16 %v674, %v673
      %v712 = vpack.c.b16 %v676, %v675
      %v750 = vsel %vm417, %v448, 0
      %v753 = vsel %vm417, %v452, 0
      %v756 = vsel %vm417, %v456, 0
      %v759 = vsel %vm417, %v460, 0
      %761 = vmatprep.subr.bf16.mxu0 0
      %762 = vmatpush1.bf16.msra.mxu0 %v677
      %763 = vmatprep.subr.bf16.mxu0 0
      %764 = vmatpush1.bf16.msra.mxu0 %v678
      %765 = vmatprep.subr.bf16.mxu0 0
      %766 = vmatpush1.bf16.msra.mxu0 %v679
      %767 = vmatprep.subr.bf16.mxu0 0
      %768 = vmatpush1.bf16.msra.mxu0 %v680
      %769 = vmatprep.subr.bf16.mxu0 0
      %770 = vmatpush1.bf16.msra.mxu0 %v681
      %771 = vmatprep.subr.bf16.mxu0 0
      %772 = vmatpush1.bf16.msra.mxu0 %v682
      %773 = vmatprep.subr.bf16.mxu0 0
      %774 = vmatpush1.bf16.msra.mxu0 %v683
      %775 = vmatprep.subr.bf16.mxu0 0
      %776 = vmatpush1.bf16.msra.mxu0 %v684
      %777 = vmatprep.subr.bf16.mxu0 0
      %778 = vmatpush1.bf16.msra.mxu0 %v685
      %779 = vmatprep.subr.bf16.mxu0 0
      %780 = vmatpush1.bf16.msra.mxu0 %v686
      %781 = vmatprep.subr.bf16.mxu0 0
      %782 = vmatpush1.bf16.msra.mxu0 %v687
      %783 = vmatprep.subr.bf16.mxu0 0
      %784 = vmatpush1.bf16.msra.mxu0 %v688
      %785 = vmatprep.subr.bf16.mxu0 0
      %786 = vmatpush1.bf16.msra.mxu0 %v689
      %787 = vmatprep.subr.bf16.mxu0 0
      %788 = vmatpush1.bf16.msra.mxu0 %v690
      %789 = vmatprep.subr.bf16.mxu0 0
      %790 = vmatpush1.bf16.msra.mxu0 %v691
      %791 = vmatprep.subr.bf16.mxu0 0
      %792 = vmatpush1.bf16.msra.mxu0 %v692
      %793 = vmatprep.mubr.bf16.mxu0 %v445
      %794 = vmatmul.mubr.bf16.gmra.mrb[0].mxu0 %v444
      %v795 = vpop.f32.mrb[0].mxu0
      %v796 = vadd.f32 0.0, %v795
      %v797 = vpop.f32.mrb[0].mxu0
      %v798 = vpop.f32.mrb[0].mxu0
      %v799 = vadd.f32 0.0, %v798
      %v800 = vpop.f32.mrb[0].mxu0
      %801 = vmatprep.mubr.bf16.mxu0 %v449
      %802 = vmatmul.mubr.bf16.gmra.mrb[0].mxu0 %v447
      %v803 = vpop.f32.mrb[0].mxu0
      %v804 = vadd.f32 0.0, %v803
      %v805 = vpop.f32.mrb[0].mxu0
      %v806 = vpop.f32.mrb[0].mxu0
      %v807 = vadd.f32 0.0, %v806
      %v808 = vpop.f32.mrb[0].mxu0
      %809 = vmatprep.mubr.bf16.mxu0 %v453
      %810 = vmatmul.mubr.bf16.gmra.mrb[0].mxu0 %v451
      %v811 = vpop.f32.mrb[0].mxu0
      %v812 = vadd.f32 0.0, %v811
      %v813 = vpop.f32.mrb[0].mxu0
      %v814 = vpop.f32.mrb[0].mxu0
      %v815 = vadd.f32 0.0, %v814
      %v816 = vpop.f32.mrb[0].mxu0
      %817 = vmatprep.mubr.bf16.mxu0 %v457
      %818 = vmatmul.mubr.bf16.gmra.mrb[0].mxu0 %v455
      %v819 = vpop.f32.mrb[0].mxu0
      %v820 = vadd.f32 0.0, %v819
      %v821 = vpop.f32.mrb[0].mxu0
      %v822 = vpop.f32.mrb[0].mxu0
      %v823 = vadd.f32 0.0, %v822
      %v824 = vpop.f32.mrb[0].mxu0
      %825 = vdwg.mxu0
      %826 = vmatprep.subr.bf16.mxu0 0
      %827 = vmatpush1.bf16.msra.mxu0 %v693
      %828 = vmatprep.subr.bf16.mxu0 0
      %829 = vmatpush1.bf16.msra.mxu0 %v694
      %830 = vmatprep.subr.bf16.mxu0 0
      %831 = vmatpush1.bf16.msra.mxu0 %v695
      %832 = vmatprep.subr.bf16.mxu0 0
      %833 = vmatpush1.bf16.msra.mxu0 %v696
      %834 = vmatprep.subr.bf16.mxu0 0
      %835 = vmatpush1.bf16.msra.mxu0 %v697
      %836 = vmatprep.subr.bf16.mxu0 0
      %837 = vmatpush1.bf16.msra.mxu0 %v698
      %838 = vmatprep.subr.bf16.mxu0 0
      %839 = vmatpush1.bf16.msra.mxu0 %v699
      %840 = vmatprep.subr.bf16.mxu0 0
      %841 = vmatpush1.bf16.msra.mxu0 %v700
      %842 = vmatprep.subr.bf16.mxu0 0
      %843 = vmatpush1.bf16.msra.mxu0 %v701
      %844 = vmatprep.subr.bf16.mxu0 0
      %845 = vmatpush1.bf16.msra.mxu0 %v702
      %846 = vmatprep.subr.bf16.mxu0 0
      %847 = vmatpush1.bf16.msra.mxu0 %v703
      %848 = vmatprep.subr.bf16.mxu0 0
      %849 = vmatpush1.bf16.msra.mxu0 %v704
      %850 = vmatprep.subr.bf16.mxu0 0
      %851 = vmatpush1.bf16.msra.mxu0 %v705
      %852 = vmatprep.subr.bf16.mxu0 0
      %853 = vmatpush1.bf16.msra.mxu0 %v706
      %854 = vmatprep.subr.bf16.mxu0 0
      %855 = vmatpush1.bf16.msra.mxu0 %v707
      %856 = vmatprep.subr.bf16.mxu0 0
      %857 = vmatpush1.bf16.msra.mxu0 %v708
      %858 = vmatprep.mubr.bf16.mxu0 %v447
      %859 = vmatmul.mubr.bf16.gmra.mrb[0].mxu0 %v446
      %v860 = vpop.f32.mrb[0].mxu0
      %v861 = vadd.f32 %v796, %v860
      %v862 = vpop.f32.mrb[0].mxu0
      %v863 = vpop.f32.mrb[0].mxu0
      %v864 = vadd.f32 %v799, %v863
      %v865 = vpop.f32.mrb[0].mxu0
      %866 = vmatprep.mubr.bf16.mxu0 %v451
      %867 = vmatmul.mubr.bf16.gmra.mrb[0].mxu0 %v450
      %v868 = vpop.f32.mrb[0].mxu0
      %v869 = vadd.f32 %v804, %v868
      %v870 = vpop.f32.mrb[0].mxu0
      %v871 = vpop.f32.mrb[0].mxu0
      %v872 = vadd.f32 %v807, %v871
      %v873 = vpop.f32.mrb[0].mxu0
      %874 = vmatprep.mubr.bf16.mxu0 %v455
      %875 = vmatmul.mubr.bf16.gmra.mrb[0].mxu0 %v454
      %v876 = vpop.f32.mrb[0].mxu0
      %v877 = vadd.f32 %v812, %v876
      %v878 = vpop.f32.mrb[0].mxu0
      %v879 = vpop.f32.mrb[0].mxu0
      %v880 = vadd.f32 %v815, %v879
      %v881 = vpop.f32.mrb[0].mxu0
      %882 = vmatprep.mubr.bf16.mxu0 %v459
      %883 = vmatmul.mubr.bf16.gmra.mrb[0].mxu0 %v458
      %v884 = vpop.f32.mrb[0].mxu0
      %v885 = vadd.f32 %v820, %v884
      %v886 = vpop.f32.mrb[0].mxu0
      %v887 = vpop.f32.mrb[0].mxu0
      %v888 = vadd.f32 %v823, %v887
      %v889 = vpop.f32.mrb[0].mxu0
      %890 = vdwg.mxu0
      %891 = vmatprep.subr.bf16.mxu0 0
      %892 = vmatpush1.bf16.msra.mxu0 %v709
      %893 = vmatprep.subr.bf16.mxu0 0
      %894 = vmatpush1.bf16.msra.mxu0 %v710
      %895 = vmatprep.subr.bf16.mxu0 0
      %896 = vmatpush1.bf16.msra.mxu0 %v711
      %897 = vmatprep.subr.bf16.mxu0 0
      %898 = vmatpush1.bf16.msra.mxu0 %v712
      %899 = vmatprep.subr.bf16.mxu0 0
      %900 = vmatpush1.bf16.msra.mxu0 0
      %901 = vmatprep.subr.bf16.mxu0 0
      %902 = vmatpush1.bf16.msra.mxu0 0
      %903 = vmatprep.subr.bf16.mxu0 0
      %904 = vmatpush1.bf16.msra.mxu0 0
      %905 = vmatprep.subr.bf16.mxu0 0
      %906 = vmatpush1.bf16.msra.mxu0 0
      %907 = vmatprep.subr.bf16.mxu0 0
      %908 = vmatpush1.bf16.msra.mxu0 0
      %909 = vmatprep.subr.bf16.mxu0 0
      %910 = vmatpush1.bf16.msra.mxu0 0
      %911 = vmatprep.subr.bf16.mxu0 0
      %912 = vmatpush1.bf16.msra.mxu0 0
      %913 = vmatprep.subr.bf16.mxu0 0
      %914 = vmatpush1.bf16.msra.mxu0 0
      %915 = vmatprep.subr.bf16.mxu0 0
      %916 = vmatpush1.bf16.msra.mxu0 0
      %917 = vmatprep.subr.bf16.mxu0 0
      %918 = vmatpush1.bf16.msra.mxu0 0
      %919 = vmatprep.subr.bf16.mxu0 0
      %920 = vmatpush1.bf16.msra.mxu0 0
      %921 = vmatprep.subr.bf16.mxu0 0
      %922 = vmatpush1.bf16.msra.mxu0 0
      %923 = vmatprep.mubr.bf16.mxu0 0
      %924 = vmatmul.mubr.bf16.gmra.mrb[0].mxu0 %v750
      %v925 = vpop.f32.mrb[0].mxu0
      %v926 = vadd.f32 %v861, %v925
      %v927 = vpop.f32.mrb[0].mxu0
      %v928 = vpop.f32.mrb[0].mxu0
      %v929 = vadd.f32 %v864, %v928
      %v930 = vpop.f32.mrb[0].mxu0
      %931 = vmatprep.mubr.bf16.mxu0 0
      %932 = vmatmul.mubr.bf16.gmra.mrb[0].mxu0 %v753
      %v933 = vpop.f32.mrb[0].mxu0
      %v934 = vadd.f32 %v869, %v933
      %v935 = vpop.f32.mrb[0].mxu0
      %v936 = vpop.f32.mrb[0].mxu0
      %v937 = vadd.f32 %v872, %v936
      %v938 = vpop.f32.mrb[0].mxu0
      %939 = vmatprep.mubr.bf16.mxu0 0
      %940 = vmatmul.mubr.bf16.gmra.mrb[0].mxu0 %v756
      %v941 = vpop.f32.mrb[0].mxu0
      %v942 = vadd.f32 %v877, %v941
      %v943 = vpop.f32.mrb[0].mxu0
      %v944 = vpop.f32.mrb[0].mxu0
      %v945 = vadd.f32 %v880, %v944
      %v946 = vpop.f32.mrb[0].mxu0
      %947 = vmatprep.mubr.bf16.mxu0 0
      %948 = vmatmul.mubr.bf16.gmra.mrb[0].mxu0 %v759
      %v949 = vpop.f32.mrb[0].mxu0
      %v950 = vadd.f32 %v885, %v949
      %v951 = vpop.f32.mrb[0].mxu0
      %v952 = vpop.f32.mrb[0].mxu0
      %v953 = vadd.f32 %v888, %v952
      %v954 = vpop.f32.mrb[0].mxu0
      %955 = vdwg.mxu0
      %v956 = vld [vmem:[%s2] sm:$0x1]
      %v958 = vlaneseq
      %v959 = vshrl.u32 %v958, 7
      %v960 = vsub.s32 0, %v959
      %v961 = vrot.slane %v956, %v960
      %v963 = vmul.f32 %v926, %v961
      %v964 = vmul.f32 %v929, %v961
      %v965 = vmul.f32 %v934, %v961
      %v966 = vmul.f32 %v937, %v961
      %v967 = vmul.f32 %v942, %v961
      %v968 = vmul.f32 %v945, %v961
      %v969 = vmul.f32 %v950, %v961
      %v970 = vmul.f32 %v953, %v961
      %v971 = vld [vmem:[%s3] sm:$0x1]
      %v973 = vlaneseq
      %v974 = vshrl.u32 %v973, 7
      %v975 = vsub.s32 0, %v974
      %v976 = vrot.slane %v971, %v975
      %v978 = vadd.f32 %v963, %v976
      %v979 = vadd.f32 %v964, %v976
      %v980 = vadd.f32 %v965, %v976
      %v981 = vadd.f32 %v966, %v976
      %v982 = vadd.f32 %v967, %v976
      %v983 = vadd.f32 %v968, %v976
      %v984 = vadd.f32 %v969, %v976
      %v985 = vadd.f32 %v970, %v976
      %v986 = vmax.f32 %v978, 0.0
      %v987 = vmax.f32 %v979, 0.0
      %v988 = vmax.f32 %v980, 0.0
      %v989 = vmax.f32 %v981, 0.0
      %v990 = vmax.f32 %v982, 0.0
      %v991 = vmax.f32 %v983, 0.0
      %v992 = vmax.f32 %v984, 0.0
      %v993 = vmax.f32 %v985, 0.0
      %vm994 = vcmask 130048
      %995 = vst.msk [vmem:[%s197] sm:$0xff] %vm994, %v986
      %996 = vst.msk [vmem:[%s197 + $0x8] sm:$0xff] %vm994, %v987
      %997 = vst.msk [vmem:[%s197 + $0x10] sm:$0xff] %vm994, %v988
      %998 = vst.msk [vmem:[%s197 + $0x18] sm:$0xff] %vm994, %v989
      %999 = vst.msk [vmem:[%s197 + $0x20] sm:$0xff] %vm994, %v990
      %1000 = vst.msk [vmem:[%s197 + $0x28] sm:$0xff] %vm994, %v991
      %1001 = vst.msk [vmem:[%s197 + $0x30] sm:$0xff] %vm994, %v992
      %1002 = vst.msk [vmem:[%s197 + $0x38] sm:$0xff] %vm994, %v993
      %p1003 = scmp.lt.s32.totalorder %s15, 1
      %s1004 = scalar_select %p1003, %s15, 1
      %s1005 = smul.addr %s1004, 8
      %s1006 = smul.addr %s1005, 8
      %s1007 = scalar_lea.vmem %s4, %s1006
      // Predicated region
      $region37: #{tpu_custom_call.1} parent=35 // pred_check
        %p1008 = pneg %p122
      $region38: #{tpu_custom_call.1} parent=35 // pred_check_branch
        %1010 = sbr.rel (%p1008) target = $region40
      $region39: #{tpu_custom_call.1} parent=35 // pred_region
        _
      $region40: #{tpu_custom_call.1} parent=35 // pred_fallthru
        _
    $region36: #{tpu_custom_call.1} parent=5 // pred_fallthru
      _
    %p1011 = scmp.le.s32.totalorder 2, %s10
    // Predicated region
    $region41: #{tpu_custom_call.1} parent=5 // pred_check
      %p1012 = pneg %p1011
    $region42: #{tpu_custom_call.1} parent=5 // pred_check_branch
      %1014 = sbr.rel (%p1012) target = $region44
    $region43: #{tpu_custom_call.1} parent=5 // pred_region
      %s1015 = ssub.s32 %s10, 2
      // Predicated region
      $region45: #{tpu_custom_call.1} parent=43 // pred_check
        %p1016 = pneg %p128
      $region46: #{tpu_custom_call.1} parent=43 // pred_check_branch
        %1018 = sbr.rel (%p1016) target = $region48
      $region47: #{tpu_custom_call.1} parent=43 // pred_region
        %p1019 = scmp.lt.s32.totalorder %s16, 1
        %s1020 = scalar_select %p1019, %s16, 1
        %s1021 = smul.addr %s1020, 8
        %s1022 = smul.addr %s1021, 8
        %s1023 = scalar_lea.vmem %s4, %s1022
      $region48: #{tpu_custom_call.1} parent=43 // pred_fallthru
        _
    $region44: #{tpu_custom_call.1} parent=5 // pred_fallthru
      _
  $region6: #{tpu_custom_call.1} parent=0 // loop_footer
    %s14 = sadd.s32 1, %s10
  $region7: #{tpu_custom_call.1} parent=0 // loop_footer_branch
    %9 = sbr.rel target = $region3
  $region8: #{tpu_custom_call.1} parent=0 // loop_exit
    _

</llo_original>
